<compile_context>
chip_gen: v7x
topology: tpu7x:2x2x1
jax: 0.10.0
libtpu: 0.0.40
codegen_flags: <defaults>
</compile_context>

<pallas_src>
import functools

import jax
import jax.numpy as jnp
from jax.experimental import pallas as pl
from jax.experimental.pallas import tpu as pltpu

_SUBLANE = 8
_LANE = 128


def _dice_sums_kernel(pred_ref, target_ref, inter_ref, union_ref,
                      *, hw, hw_tile, mask_hw):
    j = pl.program_id(1)

    # Output blocks are resident across the HW (reduction) axis: init at j == 0.
    @pl.when(j == 0)
    def _():
        inter_ref[...] = jnp.zeros_like(inter_ref)
        union_ref[...] = jnp.zeros_like(union_ref)

    p = pred_ref[...].astype(jnp.float32)
    t = target_ref[...].astype(jnp.float32)
    # sigmoid(x) == 0.5 * (tanh(0.5*x) + 1): a single EUP push instead of exp + recip.
    p = 0.5 * (jnp.tanh(0.5 * p) + 1.0)

    def _accumulate(pv, tv):
        inter_ref[...] += jnp.sum(pv * tv, axis=-1, keepdims=True)
        # Single cross-lane reduction for the union (sum(p + t) == sum(p) + sum(t)).
        union_ref[...] += jnp.sum(pv + tv, axis=-1, keepdims=True)

    if not mask_hw:
        _accumulate(p, t)
    else:
        # HW % hw_tile != 0: only the trailing block overruns H*W. Gate the
        # masking behind it so every other block stays on the cheap path.
        last = pl.num_programs(1) - 1

        @pl.when(j != last)
        def _():
            _accumulate(p, t)

        @pl.when(j == last)
        def _():
            col = jax.lax.broadcasted_iota(jnp.int32, p.shape, 1) + j * hw_tile
            valid = col < hw
            _accumulate(jnp.where(valid, p, 0.0), jnp.where(valid, t, 0.0))


def _cdiv(a, b):
    return -(-a // b)


def _round_up(x, m):
    return ((x + m - 1) // m) * m


def _round_down(x, m):
    return (x // m) * m


def _vmem_capacity_bytes():
    try:
        return int(pltpu.get_tpu_info().vmem_capacity_bytes)
    except Exception:
        return 64 * 1024 * 1024   # conservative (v7x per-TC VMEM)


def _num_tensorcores():
    # Megacore chips (2 TensorCores sharing HBM): v7x, v4. v5e/v6e have one TC.
    try:
        kind = jax.devices()[0].device_kind.lower()
    except Exception:
        return 1
    return 2 if ("v7" in kind or "v4" in kind) else 1


def _choose_tiles(nc, hw, itemsize_total, num_tc):
    """Pick (row_tile, hw_tile, vmem_limit) for large VMEM-budgeted streaming blocks."""
    capacity = _vmem_capacity_bytes()
    # 2 inputs x 2 pipeline buffers of (row_tile x hw_tile) take <= capacity/2,
    # i.e. a per-input per-buffer block element budget of capacity / (4 * bytes).
    block_elems = max(_SUBLANE * _LANE, capacity // (4 * itemsize_total))

    nc_rounded = _round_up(nc, _SUBLANE)

    if hw * _SUBLANE <= block_elems:
        # Whole rows fit even at the minimal row tile: keep the HW axis unsplit
        # (no reduction tail, no masking, single lane-dense slab per row block).
        hw_tile = hw
        row_tile = min(nc_rounded,
                       max(_SUBLANE, _round_down(block_elems // hw, _SUBLANE)))
    else:
        # Large spatial extent: tile HW along lanes and fill the byte budget.
        row_tile = min(nc_rounded, 256)
        hw_tile = _round_down(block_elems // row_tile, _LANE)
        hw_tile = max(_LANE, min(hw_tile, _round_down(hw, _LANE)))
        if hw % hw_tile != 0:
            # Prefer a multiple-of-128 divisor of HW near the target so the
            # masked tail path is never generated at all.
            lo = max(_LANE, _round_down(hw_tile // 2, _LANE))
            for cand in range(hw_tile, lo - 1, -_LANE):
                if hw % cand == 0:
                    hw_tile = cand
                    break

    # On 2-TC chips the "parallel" row axis shards across cores: keep an even
    # number of equal row blocks (and at least 2 when there is enough work).
    grid_rows = _cdiv(nc, row_tile)
    if num_tc > 1:
        if grid_rows == 1 and nc > _SUBLANE:
            row_tile = _round_up(_cdiv(nc, 2), _SUBLANE)
        elif grid_rows > 1 and grid_rows % 2 == 1:
            new_tile = _round_up(_cdiv(nc, grid_rows + 1), _SUBLANE)
            if new_tile >= _SUBLANE and _cdiv(nc, new_tile) % 2 == 0:
                row_tile = new_tile

    vmem_limit = max(32 * 1024 * 1024, (capacity * 3) // 4)
    return row_tile, hw_tile, vmem_limit


def dice_loss(pred, target, smooth=1e-5):
    """Equivalent of DiceLoss.forward(pred, target) for NCHW inputs."""
    N, C, H, W = pred.shape
    NC, HW = N * C, H * W

    p2 = pred.reshape(NC, HW)      # keep original dtypes; cast to f32 in-kernel
    t2 = target.reshape(NC, HW)

    itemsize_total = p2.dtype.itemsize + t2.dtype.itemsize
    row_tile, hw_tile, vmem_limit = _choose_tiles(
        NC, HW, itemsize_total, _num_tensorcores())

    grid_rows = _cdiv(NC, row_tile)
    grid_hw = _cdiv(HW, hw_tile)
    rows_out = grid_rows * row_tile            # outputs padded to whole row blocks
    mask_hw = (HW % hw_tile) != 0

    kernel = functools.partial(
        _dice_sums_kernel, hw=HW, hw_tile=hw_tile, mask_hw=mask_hw)

    inter, union = pl.pallas_call(
        kernel,
        out_shape=(
            jax.ShapeDtypeStruct((rows_out, 1), jnp.float32),
            jax.ShapeDtypeStruct((rows_out, 1), jnp.float32),
        ),
        grid_spec=pltpu.PrefetchScalarGridSpec(
            num_scalar_prefetch=0,
            grid=(grid_rows, grid_hw),
            in_specs=[
                pl.BlockSpec((row_tile, hw_tile), lambda i, j: (i, j)),
                pl.BlockSpec((row_tile, hw_tile), lambda i, j: (i, j)),
            ],
            out_specs=[
                pl.BlockSpec((row_tile, 1), lambda i, j: (i, 0)),
                pl.BlockSpec((row_tile, 1), lambda i, j: (i, 0)),
            ],
        ),
        compiler_params=pltpu.CompilerParams(
            dimension_semantics=("parallel", "arbitrary"),
            vmem_limit_bytes=int(vmem_limit),
        ),
    )(p2, t2)

    # Padded rows (beyond NC) hold unspecified values; drop them before reducing.
    inter = inter[:NC, 0]
    union = union[:NC, 0]
    dice = (2.0 * inter + smooth) / (union + smooth)
    return 1.0 - jnp.mean(dice)


def _dice_loss_ref(pred, target, smooth=1e-5):
    p = jax.nn.sigmoid(pred)
    inter = jnp.sum(p * target, axis=(2, 3))
    union = jnp.sum(p, axis=(2, 3)) + jnp.sum(target, axis=(2, 3))
    dice = (2.0 * inter + smooth) / (union + smooth)
    return 1.0 - jnp.mean(dice)


if __name__ == "__main__":
    key = jax.random.PRNGKey(0)
    k1, k2 = jax.random.split(key)
    N, C, H, W = 2, 4, 16, 16
    pred = jax.random.normal(k1, (N, C, H, W), dtype=jnp.float32)
    target = (jax.random.uniform(k2, (N, C, H, W)) > 0.5).astype(jnp.float32)

    loss = jax.block_until_ready(dice_loss(pred, target))
    ref = jax.block_until_ready(_dice_loss_ref(pred, target))

    assert jnp.allclose(loss, ref, atol=1e-5, rtol=1e-5), (loss, ref)
    print("KERNEL_OK")
</pallas_src>

<mosaic_0001>
module attributes {stable_mosaic.version = 11 : i64} {
  func.func @_dice_sums_kernel(%arg0: i32, %arg1: i32, %arg2: memref<8x256xf32, #tpu.memory_space<vmem>>, %arg3: memref<8x256xf32, #tpu.memory_space<vmem>>, %arg4: memref<8x1xf32, #tpu.memory_space<vmem>>, %arg5: memref<8x1xf32, #tpu.memory_space<vmem>>) attributes {dimension_semantics = [#tpu.dimension_semantics<parallel>, #tpu.dimension_semantics<arbitrary>], iteration_bounds = array<i64: 1, 1>, scalar_prefetch = 0 : i64, scratch_operands = 0 : i64, tpu.core_type = #tpu.core_type<tc>, window_params = [{transform_indices = @transform_0, window_bounds = array<i64: 8, 256>}, {transform_indices = @transform_1, window_bounds = array<i64: 8, 256>}, {transform_indices = @transform_2, window_bounds = array<i64: 8, 1>}, {transform_indices = @transform_3, window_bounds = array<i64: 8, 1>}]} {
    %c0_i32 = arith.constant 0 : i32
    %0 = arith.cmpi eq, %arg1, %c0_i32 : i32
    %1 = arith.extui %0 : i1 to i32
    %c0_i32_0 = arith.constant 0 : i32
    %2 = arith.cmpi ne, %1, %c0_i32_0 : i32
    scf.if %2 {
      %cst_16 = arith.constant 0.000000e+00 : f32
      %24 = vector.broadcast %cst_16 : f32 to vector<8x1xf32>
      %c0_17 = arith.constant 0 : index
      %c0_18 = arith.constant 0 : index
      %25 = vector.load %arg4[%c0_17, %c0_18] : memref<8x1xf32, #tpu.memory_space<vmem>>, vector<8x1xf32>
      tpu.vector_store %arg4[%c0_17, %c0_18], %24 {strides = array<i32>} : memref<8x1xf32, #tpu.memory_space<vmem>>, vector<8x1xf32>,
      %cst_19 = arith.constant 0.000000e+00 : f32
      %26 = vector.broadcast %cst_19 : f32 to vector<8x1xf32>
      %c0_20 = arith.constant 0 : index
      %c0_21 = arith.constant 0 : index
      %27 = vector.load %arg5[%c0_20, %c0_21] : memref<8x1xf32, #tpu.memory_space<vmem>>, vector<8x1xf32>
      tpu.vector_store %arg5[%c0_20, %c0_21], %26 {strides = array<i32>} : memref<8x1xf32, #tpu.memory_space<vmem>>, vector<8x1xf32>,
    } else {
    }
    %c0 = arith.constant 0 : index
    %c0_1 = arith.constant 0 : index
    %3 = vector.load %arg2[%c0, %c0_1] : memref<8x256xf32, #tpu.memory_space<vmem>>, vector<8x256xf32>
    %c0_2 = arith.constant 0 : index
    %c0_3 = arith.constant 0 : index
    %4 = vector.load %arg3[%c0_2, %c0_3] : memref<8x256xf32, #tpu.memory_space<vmem>>, vector<8x256xf32>
    %cst = arith.constant 5.000000e-01 : f32
    %5 = vector.broadcast %cst : f32 to vector<8x256xf32>
    %6 = arith.mulf %5, %3 : vector<8x256xf32>
    %7 = math.tanh %6 : vector<8x256xf32>
    %cst_4 = arith.constant 1.000000e+00 : f32
    %8 = vector.broadcast %cst_4 : f32 to vector<8x256xf32>
    %9 = arith.addf %7, %8 : vector<8x256xf32>
    %cst_5 = arith.constant 5.000000e-01 : f32
    %10 = vector.broadcast %cst_5 : f32 to vector<8x256xf32>
    %11 = arith.mulf %10, %9 : vector<8x256xf32>
    %c0_6 = arith.constant 0 : index
    %c0_7 = arith.constant 0 : index
    %12 = vector.load %arg4[%c0_6, %c0_7] : memref<8x1xf32, #tpu.memory_space<vmem>>, vector<8x1xf32>
    %13 = arith.mulf %11, %4 : vector<8x256xf32>
    %cst_8 = arith.constant dense<0.000000e+00> : vector<8xf32>
    %14 = vector.multi_reduction <add>, %13, %cst_8 [1] : vector<8x256xf32> to vector<8xf32>
    %15 = vector.shape_cast %14 : vector<8xf32> to vector<8x1xf32>
    %16 = arith.addf %12, %15 : vector<8x1xf32>
    %c0_9 = arith.constant 0 : index
    %c0_10 = arith.constant 0 : index
    %17 = vector.load %arg4[%c0_9, %c0_10] : memref<8x1xf32, #tpu.memory_space<vmem>>, vector<8x1xf32>
    tpu.vector_store %arg4[%c0_9, %c0_10], %16 {strides = array<i32>} : memref<8x1xf32, #tpu.memory_space<vmem>>, vector<8x1xf32>,
    %c0_11 = arith.constant 0 : index
    %c0_12 = arith.constant 0 : index
    %18 = vector.load %arg5[%c0_11, %c0_12] : memref<8x1xf32, #tpu.memory_space<vmem>>, vector<8x1xf32>
    %19 = arith.addf %11, %4 : vector<8x256xf32>
    %cst_13 = arith.constant dense<0.000000e+00> : vector<8xf32>
    %20 = vector.multi_reduction <add>, %19, %cst_13 [1] : vector<8x256xf32> to vector<8xf32>
    %21 = vector.shape_cast %20 : vector<8xf32> to vector<8x1xf32>
    %22 = arith.addf %18, %21 : vector<8x1xf32>
    %c0_14 = arith.constant 0 : index
    %c0_15 = arith.constant 0 : index
    %23 = vector.load %arg5[%c0_14, %c0_15] : memref<8x1xf32, #tpu.memory_space<vmem>>, vector<8x1xf32>
    tpu.vector_store %arg5[%c0_14, %c0_15], %22 {strides = array<i32>} : memref<8x1xf32, #tpu.memory_space<vmem>>, vector<8x1xf32>,
    return
  }
  func.func @transform_0(%arg0: i32, %arg1: i32) -> (i32, i32) {
    %c0_i32 = arith.constant 0 : i32
    return %arg0, %arg1 : i32, i32
  }
  func.func @transform_1(%arg0: i32, %arg1: i32) -> (i32, i32) {
    %c0_i32 = arith.constant 0 : i32
    return %arg0, %arg1 : i32, i32
  }
  func.func @transform_2(%arg0: i32, %arg1: i32) -> (i32, i32) {
    %c0_i32 = arith.constant 0 : i32
    %c0_i32_0 = arith.constant 0 : i32
    return %arg0, %c0_i32 : i32, i32
  }
  func.func @transform_3(%arg0: i32, %arg1: i32) -> (i32, i32) {
    %c0_i32 = arith.constant 0 : i32
    %c0_i32_0 = arith.constant 0 : i32
    return %arg0, %c0_i32 : i32, i32
  }
}

</mosaic_0001>

<llo_original>
// kernel: tpu_custom_call.1
$region0: #{tpu_custom_call.1}
  #allocation0 [shape = 'u32[]', space=smem, size = 0x4, offset = 0x4, fixed_abs, tag = 'smem constant byte address 0x4 - core index']
  #allocation1 [shape = 'u32[144,128]{1,0:T(1,128)}', space=vmem, size = 0x12000, scoped, tag = 'internal scratch']
  %s0 = inlined_call_operand.hbm [shape: f32[8,256], index: 0, kind: input, shape index: {}]
  %s1 = inlined_call_operand.hbm [shape: f32[8,256], index: 1, kind: input, shape index: {}]
  %s2 = inlined_call_operand.vmem [shape: f32[8,1], index: 2, kind: output, shape index: {0}]
  %s3 = inlined_call_operand.vmem [shape: f32[8,1], index: 3, kind: output, shape index: {1}]
  %4 = xla_tuple %s2, %s3
  %s5 = sld [smem:[#allocation0]]
  $region38: #{tpu_custom_call.1} parent=0
    _
  %s7 = ssub.s32 1, %s5
  %s8 = scalar_select 0, %s7, %s5
  $region1: #{tpu_custom_call.1} parent=0
    #allocation2 [shape = 'u8[8192]{0}', space=vmem, size = 0x2000, scoped, tag = 'input window, operand 0, single buffered']
    #allocation3 [shape = 's32[1]{0}', space=sflag, size = 0x4, scoped, tag = 'scoped memory for tpu_custom_call.1']
    #allocation4 [shape = 'u8[8192]{0}', space=vmem, size = 0x2000, scoped, tag = 'input window, operand 1, single buffered']
    #allocation5 [shape = 's32[1]{0}', space=sflag, size = 0x4, scoped, tag = 'scoped memory for tpu_custom_call.1']
    %9 = vsyncpa [#allocation3], 0
    %10 = vsyncpa [#allocation5], 0
    // Predicated region
    $region2: #{tpu_custom_call.1} parent=1 // pred_check
      _
    $region3: #{tpu_custom_call.1} parent=1 // pred_check_branch
      %12 = sbr.rel (0) target = $region5
    $region4: #{tpu_custom_call.1} parent=1 // pred_region
      %s14 = ssub.s32 256, 256
      %15 = vsyncadd [#allocation3], %s14
      %s17 = sshll.u32 [#allocation2], 4
      %s18 = int_to_ptr.vmem [resolvable:$true] %s17
      %20 = dma.hbm_to_vmem [thread:$0]  %s0, 256, %s18, [#allocation3]
    $region5: #{tpu_custom_call.1} parent=1 // pred_fallthru
      _
    // Predicated region
    $region6: #{tpu_custom_call.1} parent=1 // pred_check
      _
    $region7: #{tpu_custom_call.1} parent=1 // pred_check_branch
      %22 = sbr.rel (0) target = $region9
    $region8: #{tpu_custom_call.1} parent=1 // pred_region
      %s24 = ssub.s32 256, 256
      %25 = vsyncadd [#allocation5], %s24
      %s27 = sshll.u32 [#allocation4], 4
      %s28 = int_to_ptr.vmem [resolvable:$true] %s27
      %30 = dma.hbm_to_vmem [thread:$0]  %s1, 256, %s28, [#allocation5]
    $region9: #{tpu_custom_call.1} parent=1 // pred_fallthru
      _
    // Predicated region
    $region10: #{tpu_custom_call.1} parent=1 // pred_check
      _
    $region11: #{tpu_custom_call.1} parent=1 // pred_check_branch
      %32 = sbr.rel (0) target = $region13
    $region12: #{tpu_custom_call.1} parent=1 // pred_region
      %33 = dma.done [#allocation3], 256
    $region13: #{tpu_custom_call.1} parent=1 // pred_fallthru
      _
    // Predicated region
    $region14: #{tpu_custom_call.1} parent=1 // pred_check
      _
    $region15: #{tpu_custom_call.1} parent=1 // pred_check_branch
      %35 = sbr.rel (0) target = $region17
    $region16: #{tpu_custom_call.1} parent=1 // pred_region
      %36 = dma.done [#allocation5], 256
    $region17: #{tpu_custom_call.1} parent=1 // pred_fallthru
      _
    %p37 = scmp.eq.s32.totalorder 0, 0
    // Predicated region
    $region18: #{tpu_custom_call.1} parent=1 // pred_check
      %p38 = pneg %p37
    $region19: #{tpu_custom_call.1} parent=1 // pred_check_branch
      %40 = sbr.rel (%p38) target = $region21
    $region20: #{tpu_custom_call.1} parent=1 // pred_region
      %vm41 = vcmask 7168
      %42 = vst.msk [vmem:[%s2] sm:$0xff] %vm41, 0.0
      %43 = vst.msk [vmem:[%s3] sm:$0xff] %vm41, 0.0
    $region21: #{tpu_custom_call.1} parent=1 // pred_fallthru
      _
    %v44 = vld [vmem:[#allocation2] sm:$0xff]
    %v45 = vld [vmem:[#allocation2 + $0x8] sm:$0xff]
    %v46 = vld [vmem:[#allocation4] sm:$0xff]
    %v47 = vld [vmem:[#allocation4 + $0x8] sm:$0xff]
    %v48 = vmul.f32 %v44, 0.5
    %v49 = vmul.f32 %v45, 0.5
    %v50 = vtanh.pop %v48
    %v51 = vtanh.pop %v49
    %v52 = vadd.f32 %v50, 1.0
    %v53 = vadd.f32 %v51, 1.0
    %v54 = vmul.f32 %v52, 0.5
    %v55 = vmul.f32 %v53, 0.5
    %v56 = vld [vmem:[%s2] sm:$0xff]
    %v57 = vmul.f32 %v54, %v46
    %v58 = vmul.f32 %v55, %v47
    %v59 = vadd.f32 %v57, %v58
    %60 = vadd.xlane.f32.xlu0 %v59
    %v61 = vpop.xlane.xlu0 %60
    %v62 = vadd.f32 %v56, %v61
    %vm63 = vcmask 7168
    %64 = vst.msk [vmem:[%s2] sm:$0xff] %vm63, %v62
    %v65 = vld [vmem:[%s3] sm:$0xff]
    %v66 = vadd.f32 %v54, %v46
    %v67 = vadd.f32 %v55, %v47
    %v68 = vadd.f32 %v66, %v67
    %69 = vadd.xlane.f32.xlu0 %v68
    %v70 = vpop.xlane.xlu0 %69
    %v71 = vadd.f32 %v65, %v70
    %72 = vst.msk [vmem:[%s3] sm:$0xff] %vm63, %v71
    // Predicated region
    $region22: #{tpu_custom_call.1} parent=1 // pred_check
      _
    $region23: #{tpu_custom_call.1} parent=1 // pred_check_branch
      %74 = sbr.rel (0) target = $region25
    $region24: #{tpu_custom_call.1} parent=1 // pred_region
      _
    $region25: #{tpu_custom_call.1} parent=1 // pred_fallthru
      _
    // Predicated region
    $region26: #{tpu_custom_call.1} parent=1 // pred_check
      _
    $region27: #{tpu_custom_call.1} parent=1 // pred_check_branch
      %76 = sbr.rel (0) target = $region29
    $region28: #{tpu_custom_call.1} parent=1 // pred_region
      _
    $region29: #{tpu_custom_call.1} parent=1 // pred_fallthru
      _
    // Predicated region
    $region30: #{tpu_custom_call.1} parent=1 // pred_check
      _
    $region31: #{tpu_custom_call.1} parent=1 // pred_check_branch
      %78 = sbr.rel (0) target = $region33
    $region32: #{tpu_custom_call.1} parent=1 // pred_region
      _
    $region33: #{tpu_custom_call.1} parent=1 // pred_fallthru
      _
    // Predicated region
    $region34: #{tpu_custom_call.1} parent=1 // pred_check
      _
    $region35: #{tpu_custom_call.1} parent=1 // pred_check_branch
      %80 = sbr.rel (0) target = $region37
    $region36: #{tpu_custom_call.1} parent=1 // pred_region
      _
    $region37: #{tpu_custom_call.1} parent=1 // pred_fallthru
      _
    %81 = vsyncpa [#allocation3], 1
    %82 = vsyncpa [#allocation5], 1

</llo_original>
